<compile_context>
chip_gen: v7x
topology: tpu7x:2x2x1
jax: 0.10.0
libtpu: 0.0.40
codegen_flags: <defaults>
</compile_context>

<pallas_src>
import functools

import jax
import jax.numpy as jnp
from jax import lax
from jax.experimental import pallas as pl
from jax.experimental.pallas import tpu as pltpu


def _round_up(x, m):
    return (x + m - 1) // m * m


def _pick_batch_block(N):
    """Batch elements folded per grid step (generation-specific)."""
    kind = ""
    try:
        kind = jax.devices()[0].device_kind.lower().replace(" ", "")
    except Exception:
        pass
    # v7x has 2 TensorCores/chip: keep >= 2 "parallel" grid steps so both get
    # work.  v5e/v6e have a single TC: fold the whole batch into one step.
    min_steps = 2 if ("v7" in kind or "tpu7" in kind) else 1
    if min_steps <= 1 or N < 2:
        return N
    return max(d for d in range(1, N + 1) if N % d == 0 and N // d >= min_steps)


def _vmem_limit_bytes(block_bytes):
    """Derive a VMEM limit from the real working set + device capacity."""
    cap = 64 * 1024 * 1024                      # conservative (v7x per-TC)
    try:
        cap = int(getattr(pltpu.get_tpu_info(), "vmem_capacity_bytes", cap))
    except Exception:
        pass
    want = max(8 * 1024 * 1024, 8 * int(block_bytes))
    return int(min(want, max(cap // 2, 8 * 1024 * 1024)))


def _conv_block_kernel(x_ref, w_ref, b_ref, o_ref, *, ksize, pad, H, W,
                       Lpad, Lw, Nb):
    """One block of Nb batch elements per grid step.

    x_ref : (Nb, Cinp, Lpad)   bf16, H-reflect-padded input flattened (Hp*W)
                               along lanes, zero-padded channels/lanes.
    w_ref : (Cout, K*K*Cinp)   bf16 dense weight slab (zero padded-channel cols).
    b_ref : (Cout, 1)          f32 bias.
    o_ref : (Nb, Cout, Lw)     lane-dense output (Lw = round_up(H*W, 128)).
    """
    del H  # geometry is carried by Lpad / Lw / W
    Cinp = x_ref.shape[1]                       # multiple of 8 (f32 tile rows)

    # Output column (w) index of each flat output lane i = h*W + w.
    col = lax.broadcasted_iota(jnp.int32, (Cinp, Lw), 1) % W
    # Hoisted boundary-column masks (shared by all taps / batch elements).
    boundary = sorted(set(range(pad)) | set(range(W - pad, W)))
    bmask = {w_out: col == w_out for w_out in boundary}

    # Invariant: a lane whose rolled source index wraps past Hp*W (or Lpad) is
    # either a W-out-of-range column (overwritten by the reflection selects
    # below) or a padded lane >= H*W that the wrapper slices off.  Valid lanes
    # never see wrapped data because (h+kh)*W + (w+kw-pad) < Hp*W <= Lpad
    # whenever 0 <= w+kw-pad < W (requires odd K with pad = K//2 < W).
    slabs = []
    for b in range(Nb):
        x = x_ref[b].astype(jnp.float32)                    # (Cinp, Lpad)
        roll_cache = {}

        def rolled(s, x=x, cache=roll_cache):
            # rolled(s)[c, i] == x[c, (i + s) mod Lpad], truncated to Lw lanes.
            # Static shifts; pltpu.roll runs on the XLU (overlaps MXU/VPU).
            if s not in cache:
                shift = (-s) % Lpad
                r = x if shift == 0 else pltpu.roll(x, shift, axis=1)
                cache[s] = r[:, :Lw]
            return cache[s]

        taps = []
        for kh in range(ksize):
            for kw in range(ksize):
                d = kw - pad
                tap = rolled(kh * W + d)
                # In-kernel reflect padding of the W axis.
                for w_out in range(W):
                    src = w_out + d
                    if 0 <= src < W:
                        continue
                    refl = -src if src < 0 else 2 * (W - 1) - src
                    tap = jnp.where(bmask[w_out],
                                    rolled(kh * W + (refl - w_out)), tap)
                taps.append(tap)                            # (Cinp, Lw) f32
        # Aligned sublane concat (each piece is a whole-number of f32 tiles);
        # kept in registers -- no VMEM scratch round-trip, no masked stores.
        slab_b = jnp.concatenate(taps, axis=0)              # (K*K*Cinp, Lw)
        slabs.append(slab_b.astype(jnp.bfloat16))

    # Fold the batch into the matmul's lane axis (128-multiple pieces).
    slab = slabs[0] if Nb == 1 else jnp.concatenate(slabs, axis=1)

    # Single fused MXU pass per grid step; f32 accumulation, bias + ReLU folded.
    acc = jnp.dot(w_ref[...], slab,
                  preferred_element_type=jnp.float32)       # (Cout, Nb*Lw)
    acc = jnp.maximum(acc + b_ref[...], 0.0).astype(o_ref.dtype)
    for b in range(Nb):
        o_ref[b] = acc[:, b * Lw:(b + 1) * Lw]              # lane-dense stores


def conv_block_pallas(x_nchw, weight, bias, *, ksize, activation="relu",
                      out_dtype=None):
    """x_nchw: (N, Cin, H, W); weight: (Cout, Cin, K, K) (PyTorch layout);
    bias: (Cout,).  Returns activation(conv2d_reflect_same(x)), NCHW."""
    # TODO(synk): other elementwise activations are a one-line swap in-kernel.
    assert activation == "relu"
    assert ksize % 2 == 1, "reflect 'same' geometry requires odd kernel_size"
    N, Cin, H, W = x_nchw.shape
    Cout = weight.shape[0]
    assert weight.shape == (Cout, Cin, ksize, ksize)
    pad = ksize // 2
    assert pad <= H - 1 and pad <= W - 1, "reflect padding needs pad < H, W"
    out_dtype = jnp.dtype(x_nchw.dtype if out_dtype is None else out_dtype)

    Hp = H + 2 * pad
    Lout = H * W
    Lpad = _round_up(Hp * W, 128)     # lane-align the flattened padded input
    Lw = _round_up(Lout, 128)         # lane-dense (unmasked vst) output width
    Cinp = _round_up(Cin, 8)          # full f32 sublane tiles per im2col tap

    Nb = _pick_batch_block(N)
    n_steps = N // Nb

    # Reflect-pad H only (W reflection is applied in-kernel); stay in NCHW the
    # whole way.  bf16 HBM operands, f32 accumulation in the kernel.
    x_hpad = jnp.pad(x_nchw.astype(jnp.bfloat16),
                     ((0, 0), (0, 0), (pad, pad), (0, 0)), mode="reflect")
    x_flat = x_hpad.reshape(N, Cin, Hp * W)                 # free reshape
    x_flat = jnp.pad(x_flat, ((0, 0), (0, Cinp - Cin), (0, Lpad - Hp * W)))

    # (Cout, Cin, K, K) -> dense weight slab (Cout, K*K*Cinp); column
    # t*Cinp + c (t = kh*K + kw) pairs with weight[:, c, kh, kw]; padded
    # channel columns are zero.
    w_pad = jnp.pad(weight, ((0, 0), (0, Cinp - Cin), (0, 0), (0, 0)))
    w2d = jnp.transpose(w_pad, (0, 2, 3, 1)).reshape(
        Cout, ksize * ksize * Cinp).astype(jnp.bfloat16)
    b2d = bias.astype(jnp.float32).reshape(Cout, 1)

    kernel = functools.partial(_conv_block_kernel, ksize=ksize, pad=pad,
                               H=H, W=W, Lpad=Lpad, Lw=Lw, Nb=Nb)

    flops = 2 * N * Cout * Lout * (ksize * ksize * Cin)
    bytes_accessed = (x_flat.size * 2 + w2d.size * 2 + b2d.size * 4
                      + N * Cout * Lw * out_dtype.itemsize)

    # Per-step working set (double-buffered in/out blocks + resident params).
    block_bytes = (2 * Nb * Cinp * Lpad * 2
                   + 2 * Nb * Cout * Lw * out_dtype.itemsize
                   + w2d.size * 2 + b2d.size * 4)

    out_flat = pl.pallas_call(
        kernel,
        out_shape=jax.ShapeDtypeStruct((N, Cout, Lw), out_dtype),
        grid_spec=pltpu.PrefetchScalarGridSpec(
            num_scalar_prefetch=0,
            grid=(n_steps,),                # Nb batch elements per grid step
            in_specs=[
                pl.BlockSpec((Nb, Cinp, Lpad), lambda n: (n, 0, 0)),
                pl.BlockSpec((Cout, ksize * ksize * Cinp), lambda n: (0, 0)),
                pl.BlockSpec((Cout, 1), lambda n: (0, 0)),
            ],
            out_specs=pl.BlockSpec((Nb, Cout, Lw), lambda n: (n, 0, 0)),
        ),
        compiler_params=pltpu.CompilerParams(
            dimension_semantics=("parallel",),
            vmem_limit_bytes=_vmem_limit_bytes(block_bytes)),
        cost_estimate=pl.CostEstimate(
            flops=flops, transcendentals=0, bytes_accessed=bytes_accessed),
    )(x_flat, w2d, b2d)

    # Drop lane padding (no-op when H*W % 128 == 0) and restore (N,Cout,H,W).
    return out_flat[:, :, :Lout].reshape(N, Cout, H, W)


def _reference(x_nchw, weight, bias, ksize):
    """Pure-JAX f32 reference reproducing ConvBlock.forward (ReLU)."""
    pad = ksize // 2
    x_pad = jnp.pad(x_nchw, ((0, 0), (0, 0), (pad, pad), (pad, pad)),
                    mode="reflect")
    out = lax.conv_general_dilated(
        x_pad, weight, window_strides=(1, 1), padding="VALID",
        dimension_numbers=("NCHW", "OIHW", "NCHW"),
        precision=lax.Precision.HIGHEST)
    out = out + bias[None, :, None, None]
    return jnp.maximum(out, 0.0)


if __name__ == "__main__":
    # Small shapes consistent with the module: ConvBlock(4, 8, 3, nn.ReLU)
    N, Cin, H, W = 2, 4, 16, 16
    Cout, K = 8, 3

    key = jax.random.PRNGKey(0)
    k1, k2, k3 = jax.random.split(key, 3)

    x = jax.random.normal(k1, (N, Cin, H, W), dtype=jnp.float32)
    # Deterministic synthetic params (PyTorch-shaped: (Cout, Cin, K, K)).
    fan_in = Cin * K * K
    bound = 1.0 / (fan_in ** 0.5)
    weight = jax.random.uniform(k2, (Cout, Cin, K, K), jnp.float32,
                                minval=-bound, maxval=bound)
    bias = jax.random.uniform(k3, (Cout,), jnp.float32,
                              minval=-bound, maxval=bound)

    out = conv_block_pallas(x, weight, bias, ksize=K, activation="relu")
    out = jax.block_until_ready(out)
    assert out.shape == (N, Cout, H, W)

    # (a) Tight check vs. a reference fed the same bf16-rounded operands
    #     (isolates kernel correctness under the bf16-operand / f32-accum policy).
    x_q = x.astype(jnp.bfloat16).astype(jnp.float32)
    w_q = weight.astype(jnp.bfloat16).astype(jnp.float32)
    ref_q = _reference(x_q, w_q, bias, K)
    assert jnp.allclose(out, ref_q, atol=2e-3, rtol=2e-3), \
        "mismatch vs bf16-operand reference"

    # (b) Loose check vs. full-f32 module semantics (bf16 operand rounding only).
    ref = _reference(x, weight, bias, K)
    assert jnp.allclose(out, ref, atol=5e-2, rtol=5e-2), \
        "mismatch vs f32 reference"

    print("KERNEL_OK")
</pallas_src>

<mosaic_0001>
module attributes {stable_mosaic.version = 11 : i64} {
  func.func @_conv_block_kernel(%arg0: i32, %arg1: memref<2x8x384xbf16, #tpu.memory_space<vmem>>, %arg2: memref<8x72xbf16, #tpu.memory_space<vmem>>, %arg3: memref<8x1xf32, #tpu.memory_space<vmem>>, %arg4: memref<2x8x256xf32, #tpu.memory_space<vmem>>) attributes {dimension_semantics = [#tpu.dimension_semantics<parallel>], iteration_bounds = array<i64: 1>, scalar_prefetch = 0 : i64, scratch_operands = 0 : i64, tpu.core_type = #tpu.core_type<tc>, window_params = [{transform_indices = @transform_0, window_bounds = array<i64: 2, 8, 384>}, {pipeline_mode = #tpu.pipeline_mode<synchronous>, transform_indices = @transform_1, window_bounds = array<i64: 8, 72>}, {pipeline_mode = #tpu.pipeline_mode<synchronous>, transform_indices = @transform_2, window_bounds = array<i64: 8, 1>}, {transform_indices = @transform_3, window_bounds = array<i64: 2, 8, 256>}]} {
    %0 = tpu.iota {dimensions = array<i32: 1>} : vector<8x256xi32>
    %c16_i32 = arith.constant 16 : i32
    %c0_i32 = arith.constant 0 : i32
    %1 = arith.cmpi eq, %c16_i32, %c0_i32 : i32
    %c1_i32 = arith.constant 1 : i32
    %2 = arith.select %1, %c1_i32, %c16_i32 : i32
    %3 = vector.broadcast %2 : i32 to vector<8x256xi32>
    %4 = arith.remsi %0, %3 : vector<8x256xi32>
    %c0_i32_0 = arith.constant 0 : i32
    %5 = vector.broadcast %c0_i32_0 : i32 to vector<8x256xi32>
    %6 = arith.cmpi ne, %4, %5 : vector<8x256xi32>
    %c0_i32_1 = arith.constant 0 : i32
    %7 = vector.broadcast %c0_i32_1 : i32 to vector<8x256xi32>
    %8 = arith.cmpi slt, %4, %7 : vector<8x256xi32>
    %c0_i32_2 = arith.constant 0 : i32
    %9 = arith.cmpi slt, %2, %c0_i32_2 : i32
    %10 = vector.broadcast %9 : i1 to vector<8x256xi1>
    %11 = vector.broadcast %10 : vector<8x256xi1> to vector<8x256xi1>
    %12 = arith.xori %8, %11 : vector<8x256xi1>
    %13 = arith.andi %12, %6 : vector<8x256xi1>
    %14 = vector.broadcast %2 : i32 to vector<8x256xi32>
    %15 = arith.addi %4, %14 : vector<8x256xi32>
    %16 = arith.select %13, %15, %4 : vector<8x256xi1>, vector<8x256xi32>
    %c0_i32_3 = arith.constant 0 : i32
    %17 = vector.broadcast %c0_i32_3 : i32 to vector<8x256xi32>
    %18 = arith.cmpi eq, %16, %17 : vector<8x256xi32>
    %c15_i32 = arith.constant 15 : i32
    %19 = vector.broadcast %c15_i32 : i32 to vector<8x256xi32>
    %20 = arith.cmpi eq, %16, %19 : vector<8x256xi32>
    %c0 = arith.constant 0 : index
    %c0_4 = arith.constant 0 : index
    %c0_5 = arith.constant 0 : index
    %21 = vector.load %arg1[%c0, %c0_4, %c0_5] : memref<2x8x384xbf16, #tpu.memory_space<vmem>>, vector<1x8x384xbf16>
    %22 = vector.shape_cast %21 : vector<1x8x384xbf16> to vector<8x384xbf16>
    %23 = arith.extf %22 : vector<8x384xbf16> to vector<8x384xf32>
    %c1_i32_6 = arith.constant 1 : i32
    %24 = tpu.dynamic_rotate %23 by %c1_i32_6 dim 1 : vector<8x384xf32>, i32 -> vector<8x384xf32>
    %25 = vector.extract_strided_slice %24 {offsets = [0, 0], sizes = [8, 256], strides = [1, 1]} : vector<8x384xf32> to vector<8x256xf32>
    %c383_i32 = arith.constant 383 : i32
    %26 = tpu.dynamic_rotate %23 by %c383_i32 dim 1 : vector<8x384xf32>, i32 -> vector<8x384xf32>
    %27 = vector.extract_strided_slice %26 {offsets = [0, 0], sizes = [8, 256], strides = [1, 1]} : vector<8x384xf32> to vector<8x256xf32>
    %28 = arith.select %18, %27, %25 : vector<8x256xi1>, vector<8x256xf32>
    %29 = vector.extract_strided_slice %23 {offsets = [0, 0], sizes = [8, 256], strides = [1, 1]} : vector<8x384xf32> to vector<8x256xf32>
    %30 = arith.select %20, %25, %27 : vector<8x256xi1>, vector<8x256xf32>
    %c369_i32 = arith.constant 369 : i32
    %31 = tpu.dynamic_rotate %23 by %c369_i32 dim 1 : vector<8x384xf32>, i32 -> vector<8x384xf32>
    %32 = vector.extract_strided_slice %31 {offsets = [0, 0], sizes = [8, 256], strides = [1, 1]} : vector<8x384xf32> to vector<8x256xf32>
    %c367_i32 = arith.constant 367 : i32
    %33 = tpu.dynamic_rotate %23 by %c367_i32 dim 1 : vector<8x384xf32>, i32 -> vector<8x384xf32>
    %34 = vector.extract_strided_slice %33 {offsets = [0, 0], sizes = [8, 256], strides = [1, 1]} : vector<8x384xf32> to vector<8x256xf32>
    %35 = arith.select %18, %34, %32 : vector<8x256xi1>, vector<8x256xf32>
    %c368_i32 = arith.constant 368 : i32
    %36 = tpu.dynamic_rotate %23 by %c368_i32 dim 1 : vector<8x384xf32>, i32 -> vector<8x384xf32>
    %37 = vector.extract_strided_slice %36 {offsets = [0, 0], sizes = [8, 256], strides = [1, 1]} : vector<8x384xf32> to vector<8x256xf32>
    %38 = arith.select %20, %32, %34 : vector<8x256xi1>, vector<8x256xf32>
    %c353_i32 = arith.constant 353 : i32
    %39 = tpu.dynamic_rotate %23 by %c353_i32 dim 1 : vector<8x384xf32>, i32 -> vector<8x384xf32>
    %40 = vector.extract_strided_slice %39 {offsets = [0, 0], sizes = [8, 256], strides = [1, 1]} : vector<8x384xf32> to vector<8x256xf32>
    %c351_i32 = arith.constant 351 : i32
    %41 = tpu.dynamic_rotate %23 by %c351_i32 dim 1 : vector<8x384xf32>, i32 -> vector<8x384xf32>
    %42 = vector.extract_strided_slice %41 {offsets = [0, 0], sizes = [8, 256], strides = [1, 1]} : vector<8x384xf32> to vector<8x256xf32>
    %43 = arith.select %18, %42, %40 : vector<8x256xi1>, vector<8x256xf32>
    %c352_i32 = arith.constant 352 : i32
    %44 = tpu.dynamic_rotate %23 by %c352_i32 dim 1 : vector<8x384xf32>, i32 -> vector<8x384xf32>
    %45 = vector.extract_strided_slice %44 {offsets = [0, 0], sizes = [8, 256], strides = [1, 1]} : vector<8x384xf32> to vector<8x256xf32>
    %46 = arith.select %20, %40, %42 : vector<8x256xi1>, vector<8x256xf32>
    %47 = tpu.concatenate %28, %29, %30, %35, %37, %38, %43, %45, %46 in 0 : vector<8x256xf32>, vector<8x256xf32>, vector<8x256xf32>, vector<8x256xf32>, vector<8x256xf32>, vector<8x256xf32>, vector<8x256xf32>, vector<8x256xf32>, vector<8x256xf32> -> vector<72x256xf32>
    %48 = arith.truncf %47 : vector<72x256xf32> to vector<72x256xbf16>
    %c1 = arith.constant 1 : index
    %c0_7 = arith.constant 0 : index
    %c0_8 = arith.constant 0 : index
    %49 = vector.load %arg1[%c1, %c0_7, %c0_8] : memref<2x8x384xbf16, #tpu.memory_space<vmem>>, vector<1x8x384xbf16>
    %50 = vector.shape_cast %49 : vector<1x8x384xbf16> to vector<8x384xbf16>
    %51 = arith.extf %50 : vector<8x384xbf16> to vector<8x384xf32>
    %c1_i32_9 = arith.constant 1 : i32
    %52 = tpu.dynamic_rotate %51 by %c1_i32_9 dim 1 : vector<8x384xf32>, i32 -> vector<8x384xf32>
    %53 = vector.extract_strided_slice %52 {offsets = [0, 0], sizes = [8, 256], strides = [1, 1]} : vector<8x384xf32> to vector<8x256xf32>
    %c383_i32_10 = arith.constant 383 : i32
    %54 = tpu.dynamic_rotate %51 by %c383_i32_10 dim 1 : vector<8x384xf32>, i32 -> vector<8x384xf32>
    %55 = vector.extract_strided_slice %54 {offsets = [0, 0], sizes = [8, 256], strides = [1, 1]} : vector<8x384xf32> to vector<8x256xf32>
    %56 = arith.select %18, %55, %53 : vector<8x256xi1>, vector<8x256xf32>
    %57 = vector.extract_strided_slice %51 {offsets = [0, 0], sizes = [8, 256], strides = [1, 1]} : vector<8x384xf32> to vector<8x256xf32>
    %58 = arith.select %20, %53, %55 : vector<8x256xi1>, vector<8x256xf32>
    %c369_i32_11 = arith.constant 369 : i32
    %59 = tpu.dynamic_rotate %51 by %c369_i32_11 dim 1 : vector<8x384xf32>, i32 -> vector<8x384xf32>
    %60 = vector.extract_strided_slice %59 {offsets = [0, 0], sizes = [8, 256], strides = [1, 1]} : vector<8x384xf32> to vector<8x256xf32>
    %c367_i32_12 = arith.constant 367 : i32
    %61 = tpu.dynamic_rotate %51 by %c367_i32_12 dim 1 : vector<8x384xf32>, i32 -> vector<8x384xf32>
    %62 = vector.extract_strided_slice %61 {offsets = [0, 0], sizes = [8, 256], strides = [1, 1]} : vector<8x384xf32> to vector<8x256xf32>
    %63 = arith.select %18, %62, %60 : vector<8x256xi1>, vector<8x256xf32>
    %c368_i32_13 = arith.constant 368 : i32
    %64 = tpu.dynamic_rotate %51 by %c368_i32_13 dim 1 : vector<8x384xf32>, i32 -> vector<8x384xf32>
    %65 = vector.extract_strided_slice %64 {offsets = [0, 0], sizes = [8, 256], strides = [1, 1]} : vector<8x384xf32> to vector<8x256xf32>
    %66 = arith.select %20, %60, %62 : vector<8x256xi1>, vector<8x256xf32>
    %c353_i32_14 = arith.constant 353 : i32
    %67 = tpu.dynamic_rotate %51 by %c353_i32_14 dim 1 : vector<8x384xf32>, i32 -> vector<8x384xf32>
    %68 = vector.extract_strided_slice %67 {offsets = [0, 0], sizes = [8, 256], strides = [1, 1]} : vector<8x384xf32> to vector<8x256xf32>
    %c351_i32_15 = arith.constant 351 : i32
    %69 = tpu.dynamic_rotate %51 by %c351_i32_15 dim 1 : vector<8x384xf32>, i32 -> vector<8x384xf32>
    %70 = vector.extract_strided_slice %69 {offsets = [0, 0], sizes = [8, 256], strides = [1, 1]} : vector<8x384xf32> to vector<8x256xf32>
    %71 = arith.select %18, %70, %68 : vector<8x256xi1>, vector<8x256xf32>
    %c352_i32_16 = arith.constant 352 : i32
    %72 = tpu.dynamic_rotate %51 by %c352_i32_16 dim 1 : vector<8x384xf32>, i32 -> vector<8x384xf32>
    %73 = vector.extract_strided_slice %72 {offsets = [0, 0], sizes = [8, 256], strides = [1, 1]} : vector<8x384xf32> to vector<8x256xf32>
    %74 = arith.select %20, %68, %70 : vector<8x256xi1>, vector<8x256xf32>
    %75 = tpu.concatenate %56, %57, %58, %63, %65, %66, %71, %73, %74 in 0 : vector<8x256xf32>, vector<8x256xf32>, vector<8x256xf32>, vector<8x256xf32>, vector<8x256xf32>, vector<8x256xf32>, vector<8x256xf32>, vector<8x256xf32>, vector<8x256xf32> -> vector<72x256xf32>
    %76 = arith.truncf %75 : vector<72x256xf32> to vector<72x256xbf16>
    %77 = tpu.concatenate %48, %76 in 1 : vector<72x256xbf16>, vector<72x256xbf16> -> vector<72x512xbf16>
    %c0_17 = arith.constant 0 : index
    %c0_18 = arith.constant 0 : index
    %78 = vector.load %arg2[%c0_17, %c0_18] : memref<8x72xbf16, #tpu.memory_space<vmem>>, vector<8x72xbf16>
    %cst = arith.constant dense<0.000000e+00> : vector<8x512xf32>
    %79 = tpu.matmul %78, %77, %cst {dimension_numbers = #tpu.dot_dimension_numbers<[1], [0], [0], [1], [0, 0, 1, 1], [], []>} : vector<8x72xbf16>, vector<72x512xbf16>, vector<8x512xf32> -> vector<8x512xf32>
    %c0_19 = arith.constant 0 : index
    %c0_20 = arith.constant 0 : index
    %80 = vector.load %arg3[%c0_19, %c0_20] : memref<8x1xf32, #tpu.memory_space<vmem>>, vector<8x1xf32>
    %81 = vector.broadcast %80 : vector<8x1xf32> to vector<8x512xf32>
    %82 = arith.addf %79, %81 : vector<8x512xf32>
    %cst_21 = arith.constant 0.000000e+00 : f32
    %83 = vector.broadcast %cst_21 : f32 to vector<8x512xf32>
    %84 = arith.maximumf %82, %83 : vector<8x512xf32>
    %85 = vector.extract_strided_slice %84 {offsets = [0, 0], sizes = [8, 256], strides = [1, 1]} : vector<8x512xf32> to vector<8x256xf32>
    %c0_22 = arith.constant 0 : index
    %c0_23 = arith.constant 0 : index
    %c0_24 = arith.constant 0 : index
    %86 = vector.load %arg4[%c0_22, %c0_23, %c0_24] : memref<2x8x256xf32, #tpu.memory_space<vmem>>, vector<1x8x256xf32>
    %87 = vector.shape_cast %86 : vector<1x8x256xf32> to vector<8x256xf32>
    %88 = vector.shape_cast %85 : vector<8x256xf32> to vector<1x8x256xf32>
    tpu.vector_store %arg4[%c0_22, %c0_23, %c0_24], %88 {strides = array<i32>} : memref<2x8x256xf32, #tpu.memory_space<vmem>>, vector<1x8x256xf32>,
    %89 = vector.extract_strided_slice %84 {offsets = [0, 256], sizes = [8, 256], strides = [1, 1]} : vector<8x512xf32> to vector<8x256xf32>
    %c1_25 = arith.constant 1 : index
    %c0_26 = arith.constant 0 : index
    %c0_27 = arith.constant 0 : index
    %90 = vector.load %arg4[%c1_25, %c0_26, %c0_27] : memref<2x8x256xf32, #tpu.memory_space<vmem>>, vector<1x8x256xf32>
    %91 = vector.shape_cast %90 : vector<1x8x256xf32> to vector<8x256xf32>
    %92 = vector.shape_cast %89 : vector<8x256xf32> to vector<1x8x256xf32>
    tpu.vector_store %arg4[%c1_25, %c0_26, %c0_27], %92 {strides = array<i32>} : memref<2x8x256xf32, #tpu.memory_space<vmem>>, vector<1x8x256xf32>,
    return
  }
  func.func @transform_0(%arg0: i32) -> (i32, i32, i32) {
    %c0_i32 = arith.constant 0 : i32
    %c0_i32_0 = arith.constant 0 : i32
    %c0_i32_1 = arith.constant 0 : i32
    return %arg0, %c0_i32, %c0_i32_0 : i32, i32, i32
  }
  func.func @transform_1(%arg0: i32) -> (i32, i32) {
    %c0_i32 = arith.constant 0 : i32
    %c0_i32_0 = arith.constant 0 : i32
    %c0_i32_1 = arith.constant 0 : i32
    return %c0_i32, %c0_i32_0 : i32, i32
  }
  func.func @transform_2(%arg0: i32) -> (i32, i32) {
    %c0_i32 = arith.constant 0 : i32
    %c0_i32_0 = arith.constant 0 : i32
    %c0_i32_1 = arith.constant 0 : i32
    return %c0_i32, %c0_i32_0 : i32, i32
  }
  func.func @transform_3(%arg0: i32) -> (i32, i32, i32) {
    %c0_i32 = arith.constant 0 : i32
    %c0_i32_0 = arith.constant 0 : i32
    %c0_i32_1 = arith.constant 0 : i32
    return %arg0, %c0_i32, %c0_i32_0 : i32, i32, i32
  }
}

</mosaic_0001>

<llo_original>
// kernel: tpu_custom_call.1
$region0: #{tpu_custom_call.1}
  #allocation0 [shape = 'u32[]', space=smem, size = 0x4, offset = 0x4, fixed_abs, tag = 'smem constant byte address 0x4 - core index']
  #allocation1 [shape = 'u32[144,128]{1,0:T(1,128)}', space=vmem, size = 0x12000, scoped, tag = 'internal scratch']
  %s0 = inlined_call_operand.hbm [shape: bf16[2,8,384], index: 0, kind: input, shape index: {}]
  %s1 = inlined_call_operand.vmem [shape: bf16[8,72], index: 1, kind: input, shape index: {}]
  %s2 = inlined_call_operand.vmem [shape: f32[8,1], index: 2, kind: input, shape index: {}]
  %s3 = inlined_call_operand.hbm [shape: f32[2,8,256], index: 3, kind: output, shape index: {}]
  %s4 = sld [smem:[#allocation0]]
  $region26: #{tpu_custom_call.1} parent=0
    _
  %s6 = ssub.s32 1, %s4
  %s7 = scalar_select 0, %s6, %s4
  $region1: #{tpu_custom_call.1} parent=0
    #allocation2 [shape = 'u8[12288]{0}', space=vmem, size = 0x3000, scoped, tag = 'input window, operand 0, single buffered']
    #allocation3 [shape = 's32[1]{0}', space=sflag, size = 0x4, scoped, tag = 'scoped memory for tpu_custom_call.1']
    #allocation4 [shape = 's32[1]{0}', space=sflag, size = 0x4, scoped, tag = 'scoped memory for tpu_custom_call.1']
    #allocation5 [shape = 'u8[16384]{0}', space=vmem, size = 0x4000, scoped, tag = 'output window, operand 0, single buffered']
    %8 = vsyncpa [#allocation3], 0
    %9 = vsyncpa [#allocation4], 0
    // Predicated region
    $region2: #{tpu_custom_call.1} parent=1 // pred_check
      _
    $region3: #{tpu_custom_call.1} parent=1 // pred_check_branch
      %11 = sbr.rel (0) target = $region5
    $region4: #{tpu_custom_call.1} parent=1 // pred_region
      %s13 = ssub.s32 384, 384
      %14 = vsyncadd [#allocation3], %s13
      %s15 = sshll.u32 [#allocation2], 4
      %s16 = int_to_ptr.vmem [resolvable:$true] %s15
      %21 = dma.hbm_to_vmem [thread:$0]  %s0, 384, %s16, [#allocation3], 192, 192, 12
    $region5: #{tpu_custom_call.1} parent=1 // pred_fallthru
      _
    // Predicated region
    $region6: #{tpu_custom_call.1} parent=1 // pred_check
      _
    $region7: #{tpu_custom_call.1} parent=1 // pred_check_branch
      %23 = sbr.rel (0) target = $region9
    $region8: #{tpu_custom_call.1} parent=1 // pred_region
      _
    $region9: #{tpu_custom_call.1} parent=1 // pred_fallthru
      _
    // Predicated region
    $region10: #{tpu_custom_call.1} parent=1 // pred_check
      _
    $region11: #{tpu_custom_call.1} parent=1 // pred_check_branch
      %25 = sbr.rel (0) target = $region13
    $region12: #{tpu_custom_call.1} parent=1 // pred_region
      _
    $region13: #{tpu_custom_call.1} parent=1 // pred_fallthru
      _
    // Predicated region
    $region14: #{tpu_custom_call.1} parent=1 // pred_check
      _
    $region15: #{tpu_custom_call.1} parent=1 // pred_check_branch
      %27 = sbr.rel (0) target = $region17
    $region16: #{tpu_custom_call.1} parent=1 // pred_region
      %28 = dma.done [#allocation3], 384
    $region17: #{tpu_custom_call.1} parent=1 // pred_fallthru
      _
    %v30 = vlaneseq
    %v31 = vand.u32 %v30, 127
    %v32 = vadd.s32 %v31, 128
    %vm33 = vcmp.lt.s32.totalorder %v31, 0
    %v34 = vsub.s32 0, %v31
    %v35 = vsel %vm33, %v34, %v31
    %v36 = vshrl.u32 %v35, 4
    %v37 = vand.u32 %v35, 15
    %v38 = vsub.s32 0, %v37
    %v39 = vsel %vm33, %v38, %v37
    %vm40 = vcmp.lt.s32.totalorder %v32, 0
    %v41 = vsub.s32 0, %v32
    %v42 = vsel %vm40, %v41, %v32
    %v43 = vshrl.u32 %v42, 4
    %v44 = vand.u32 %v42, 15
    %v45 = vsub.s32 0, %v44
    %v46 = vsel %vm40, %v45, %v44
    %vm47 = vcmp.ne.s32.totalorder %v39, 0
    %vm48 = vcmp.ne.s32.totalorder %v46, 0
    %vm49 = vcmp.lt.s32.totalorder %v39, 0
    %vm50 = vcmp.lt.s32.totalorder %v46, 0
    %vm51 = vmand %vm49, %vm47
    %vm52 = vmand %vm50, %vm48
    %v53 = vadd.s32 %v39, 16
    %v54 = vadd.s32 %v46, 16
    %v55 = vsel %vm51, %v53, %v39
    %v56 = vsel %vm52, %v54, %v46
    %vm57 = vcmp.eq.s32.totalorder %v55, 0
    %vm58 = vcmp.eq.s32.totalorder %v56, 0
    %vm59 = vcmp.eq.s32.totalorder %v55, 15
    %vm60 = vcmp.eq.s32.totalorder %v56, 15
    %v61 = vld [vmem:[#allocation2] sm:$0xff]
    %v62 = vld [vmem:[#allocation2 + $0x8] sm:$0xf]
    %v63 = vunpack.c.l.bf16 %v61
    %v64 = vunpack.c.h.bf16 %v61
    %v65 = vunpack.c.l.bf16 %v62
    %66 = vrot.lane.b32.xlu0 %v63, 1
    %v67 = vpop.permute.xlu0 %66
    %68 = vrot.lane.b32.xlu0 %v64, 1
    %v69 = vpop.permute.xlu0 %68
    %70 = vrot.lane.b32.xlu0 %v65, 1
    %v71 = vpop.permute.xlu0 %70
    %vm72 = vcmp.lt.s32.totalorder %v31, 1
    %v73 = vsel %vm72, %v67, %v69
    %v74 = vsel %vm72, %v71, %v67
    %75 = vrot.lane.b32.xlu0 %v63, 127
    %v76 = vpop.permute.xlu0 %75
    %77 = vrot.lane.b32.xlu0 %v64, 127
    %v78 = vpop.permute.xlu0 %77
    %79 = vrot.lane.b32.xlu0 %v65, 127
    %v80 = vpop.permute.xlu0 %79
    %vm81 = vcmp.lt.s32.totalorder %v31, 127
    %v82 = vsel %vm81, %v78, %v80
    %v83 = vsel %vm81, %v76, %v78
    %v84 = vsel %vm57, %v83, %v74
    %v85 = vsel %vm58, %v82, %v73
    %v86 = vsel %vm59, %v74, %v83
    %v87 = vsel %vm60, %v73, %v82
    %88 = vrot.lane.b32.xlu0 %v63, 113
    %v89 = vpop.permute.xlu0 %88
    %90 = vrot.lane.b32.xlu0 %v64, 113
    %v91 = vpop.permute.xlu0 %90
    %92 = vrot.lane.b32.xlu0 %v65, 113
    %v93 = vpop.permute.xlu0 %92
    %vm94 = vcmp.lt.s32.totalorder %v31, 113
    %v95 = vsel %vm94, %v91, %v93
    %v96 = vsel %vm94, %v89, %v91
    %97 = vrot.lane.b32.xlu0 %v63, 111
    %v98 = vpop.permute.xlu0 %97
    %99 = vrot.lane.b32.xlu0 %v64, 111
    %v100 = vpop.permute.xlu0 %99
    %101 = vrot.lane.b32.xlu0 %v65, 111
    %v102 = vpop.permute.xlu0 %101
    %vm103 = vcmp.lt.s32.totalorder %v31, 111
    %v104 = vsel %vm103, %v100, %v102
    %v105 = vsel %vm103, %v98, %v100
    %v106 = vsel %vm57, %v105, %v96
    %v107 = vsel %vm58, %v104, %v95
    %108 = vrot.lane.b32.xlu0 %v63, 112
    %v109 = vpop.permute.xlu0 %108
    %110 = vrot.lane.b32.xlu0 %v64, 112
    %v111 = vpop.permute.xlu0 %110
    %112 = vrot.lane.b32.xlu0 %v65, 112
    %v113 = vpop.permute.xlu0 %112
    %vm114 = vcmp.lt.s32.totalorder %v31, 112
    %v115 = vsel %vm114, %v111, %v113
    %v116 = vsel %vm114, %v109, %v111
    %v117 = vsel %vm59, %v96, %v105
    %v118 = vsel %vm60, %v95, %v104
    %119 = vrot.lane.b32.xlu0 %v63, 97
    %v120 = vpop.permute.xlu0 %119
    %121 = vrot.lane.b32.xlu0 %v64, 97
    %v122 = vpop.permute.xlu0 %121
    %123 = vrot.lane.b32.xlu0 %v65, 97
    %v124 = vpop.permute.xlu0 %123
    %vm125 = vcmp.lt.s32.totalorder %v31, 97
    %v126 = vsel %vm125, %v122, %v124
    %v127 = vsel %vm125, %v120, %v122
    %128 = vrot.lane.b32.xlu0 %v63, 95
    %v129 = vpop.permute.xlu0 %128
    %130 = vrot.lane.b32.xlu0 %v64, 95
    %v131 = vpop.permute.xlu0 %130
    %132 = vrot.lane.b32.xlu0 %v65, 95
    %v133 = vpop.permute.xlu0 %132
    %vm134 = vcmp.lt.s32.totalorder %v31, 95
    %v135 = vsel %vm134, %v131, %v133
    %v136 = vsel %vm134, %v129, %v131
    %v137 = vsel %vm57, %v136, %v127
    %v138 = vsel %vm58, %v135, %v126
    %139 = vrot.lane.b32.xlu0 %v63, 96
    %v140 = vpop.permute.xlu0 %139
    %141 = vrot.lane.b32.xlu0 %v64, 96
    %v142 = vpop.permute.xlu0 %141
    %143 = vrot.lane.b32.xlu0 %v65, 96
    %v144 = vpop.permute.xlu0 %143
    %vm145 = vcmp.lt.s32.totalorder %v31, 96
    %v146 = vsel %vm145, %v142, %v144
    %v147 = vsel %vm145, %v140, %v142
    %v148 = vsel %vm59, %v127, %v136
    %v149 = vsel %vm60, %v126, %v135
    %v150 = vpack.c.bf16 %v63, %v84
    %v151 = vpack.c.bf16 %v64, %v85
    %v152 = vpack.c.bf16 %v106, %v86
    %v153 = vpack.c.bf16 %v107, %v87
    %v154 = vpack.c.bf16 %v117, %v116
    %v155 = vpack.c.bf16 %v118, %v115
    %v156 = vpack.c.bf16 %v147, %v137
    %v157 = vpack.c.bf16 %v146, %v138
    %v158 = vpack.c.bf16 %v148, %v148
    %v159 = vpack.c.bf16 %v149, %v149
    %s160 = scalar_lea.vmem [#allocation2], 12
    %v161 = vld [vmem:[%s160] sm:$0xff]
    %v162 = vld [vmem:[%s160 + $0x8] sm:$0xf]
    %v163 = vunpack.c.l.bf16 %v161
    %v164 = vunpack.c.h.bf16 %v161
    %v165 = vunpack.c.l.bf16 %v162
    %166 = vrot.lane.b32.xlu0 %v163, 1
    %v167 = vpop.permute.xlu0 %166
    %168 = vrot.lane.b32.xlu0 %v164, 1
    %v169 = vpop.permute.xlu0 %168
    %170 = vrot.lane.b32.xlu0 %v165, 1
    %v171 = vpop.permute.xlu0 %170
    %v172 = vsel %vm72, %v167, %v169
    %v173 = vsel %vm72, %v171, %v167
    %174 = vrot.lane.b32.xlu0 %v163, 127
    %v175 = vpop.permute.xlu0 %174
    %176 = vrot.lane.b32.xlu0 %v164, 127
    %v177 = vpop.permute.xlu0 %176
    %178 = vrot.lane.b32.xlu0 %v165, 127
    %v179 = vpop.permute.xlu0 %178
    %v180 = vsel %vm81, %v177, %v179
    %v181 = vsel %vm81, %v175, %v177
    %v182 = vsel %vm57, %v181, %v173
    %v183 = vsel %vm58, %v180, %v172
    %v184 = vsel %vm59, %v173, %v181
    %v185 = vsel %vm60, %v172, %v180
    %186 = vrot.lane.b32.xlu0 %v163, 113
    %v187 = vpop.permute.xlu0 %186
    %188 = vrot.lane.b32.xlu0 %v164, 113
    %v189 = vpop.permute.xlu0 %188
    %190 = vrot.lane.b32.xlu0 %v165, 113
    %v191 = vpop.permute.xlu0 %190
    %v192 = vsel %vm94, %v189, %v191
    %v193 = vsel %vm94, %v187, %v189
    %194 = vrot.lane.b32.xlu0 %v163, 111
    %v195 = vpop.permute.xlu0 %194
    %196 = vrot.lane.b32.xlu0 %v164, 111
    %v197 = vpop.permute.xlu0 %196
    %198 = vrot.lane.b32.xlu0 %v165, 111
    %v199 = vpop.permute.xlu0 %198
    %v200 = vsel %vm103, %v197, %v199
    %v201 = vsel %vm103, %v195, %v197
    %v202 = vsel %vm57, %v201, %v193
    %v203 = vsel %vm58, %v200, %v192
    %204 = vrot.lane.b32.xlu0 %v163, 112
    %v205 = vpop.permute.xlu0 %204
    %206 = vrot.lane.b32.xlu0 %v164, 112
    %v207 = vpop.permute.xlu0 %206
    %208 = vrot.lane.b32.xlu0 %v165, 112
    %v209 = vpop.permute.xlu0 %208
    %v210 = vsel %vm114, %v207, %v209
    %v211 = vsel %vm114, %v205, %v207
    %v212 = vsel %vm59, %v193, %v201
    %v213 = vsel %vm60, %v192, %v200
    %214 = vrot.lane.b32.xlu0 %v163, 97
    %v215 = vpop.permute.xlu0 %214
    %216 = vrot.lane.b32.xlu0 %v164, 97
    %v217 = vpop.permute.xlu0 %216
    %218 = vrot.lane.b32.xlu0 %v165, 97
    %v219 = vpop.permute.xlu0 %218
    %v220 = vsel %vm125, %v217, %v219
    %v221 = vsel %vm125, %v215, %v217
    %222 = vrot.lane.b32.xlu0 %v163, 95
    %v223 = vpop.permute.xlu0 %222
    %224 = vrot.lane.b32.xlu0 %v164, 95
    %v225 = vpop.permute.xlu0 %224
    %226 = vrot.lane.b32.xlu0 %v165, 95
    %v227 = vpop.permute.xlu0 %226
    %v228 = vsel %vm134, %v225, %v227
    %v229 = vsel %vm134, %v223, %v225
    %v230 = vsel %vm57, %v229, %v221
    %v231 = vsel %vm58, %v228, %v220
    %232 = vrot.lane.b32.xlu0 %v163, 96
    %v233 = vpop.permute.xlu0 %232
    %234 = vrot.lane.b32.xlu0 %v164, 96
    %v235 = vpop.permute.xlu0 %234
    %236 = vrot.lane.b32.xlu0 %v165, 96
    %v237 = vpop.permute.xlu0 %236
    %v238 = vsel %vm145, %v235, %v237
    %v239 = vsel %vm145, %v233, %v235
    %v240 = vsel %vm59, %v221, %v229
    %v241 = vsel %vm60, %v220, %v228
    %v242 = vpack.c.bf16 %v163, %v182
    %v243 = vpack.c.bf16 %v164, %v183
    %v244 = vpack.c.bf16 %v202, %v184
    %v245 = vpack.c.bf16 %v203, %v185
    %v246 = vpack.c.bf16 %v212, %v211
    %v247 = vpack.c.bf16 %v213, %v210
    %v248 = vpack.c.bf16 %v239, %v230
    %v249 = vpack.c.bf16 %v238, %v231
    %v250 = vpack.c.bf16 %v240, %v240
    %v251 = vpack.c.bf16 %v241, %v241
    %v252 = vld [vmem:[%s1] sm:$0xf]
    %v253 = vld [vmem:[%s2] sm:$0xff]
    %255 = vset.pattern.permute.xlu0 0
    %256 = vperm.xlu0 %255, %v253
    %v257 = vpop.permute.xlu0 %256
    %vm259 = vcmask 588800
    %v261 = vsel %vm259, %v252, 0
    %vm263 = vcmask 1043456
    %v265 = vsel %vm263, %v158, 0
    %v268 = vsel %vm263, %v159, 0
    %v271 = vsel %vm263, %v250, 0
    %v274 = vsel %vm263, %v251, 0
    %276 = vmatprep.subr.bf16.mxu0 %v151
    %277 = vmatpush1.bf16.msra.mxu0 %v150
    %278 = vmatprep.subr.bf16.mxu0 %v153
    %279 = vmatpush1.bf16.msra.mxu0 %v152
    %280 = vmatprep.subr.bf16.mxu0 %v155
    %281 = vmatpush1.bf16.msra.mxu0 %v154
    %282 = vmatprep.subr.bf16.mxu0 %v157
    %283 = vmatpush1.bf16.msra.mxu0 %v156
    %284 = vmatprep.subr.bf16.mxu0 %v268
    %285 = vmatpush1.bf16.msra.mxu0 %v265
    %286 = vmatprep.subr.bf16.mxu0 0
    %287 = vmatpush1.bf16.msra.mxu0 0
    %288 = vmatprep.subr.bf16.mxu0 0
    %289 = vmatpush1.bf16.msra.mxu0 0
    %290 = vmatprep.subr.bf16.mxu0 0
    %291 = vmatpush1.bf16.msra.mxu0 0
    %292 = vmatprep.subr.bf16.mxu0 0
    %293 = vmatpush1.bf16.msra.mxu0 0
    %294 = vmatprep.subr.bf16.mxu0 0
    %295 = vmatpush1.bf16.msra.mxu0 0
    %296 = vmatprep.subr.bf16.mxu0 0
    %297 = vmatpush1.bf16.msra.mxu0 0
    %298 = vmatprep.subr.bf16.mxu0 0
    %299 = vmatpush1.bf16.msra.mxu0 0
    %300 = vmatprep.subr.bf16.mxu0 0
    %301 = vmatpush1.bf16.msra.mxu0 0
    %302 = vmatprep.subr.bf16.mxu0 0
    %303 = vmatpush1.bf16.msra.mxu0 0
    %304 = vmatprep.subr.bf16.mxu0 0
    %305 = vmatpush1.bf16.msra.mxu0 0
    %306 = vmatprep.subr.bf16.mxu0 0
    %307 = vmatpush1.bf16.msra.mxu0 0
    %308 = vmatprep.mubr.bf16.mxu0 0
    %309 = vmatmul.mubr.bf16.gmra.mrb[0].mxu0 %v261
    %v310 = vpop.f32.mrb[0].mxu0
    %v311 = vadd.f32 %v257, %v310
    %v312 = vpop.f32.mrb[0].mxu0
    %v313 = vadd.f32 %v257, %v312
    %v314 = vpop.f32.mrb[0].mxu0
    %v315 = vpop.f32.mrb[0].mxu0
    %316 = vdwg.mxu0
    %317 = vmatprep.subr.bf16.mxu0 %v243
    %318 = vmatpush1.bf16.msra.mxu0 %v242
    %319 = vmatprep.subr.bf16.mxu0 %v245
    %320 = vmatpush1.bf16.msra.mxu0 %v244
    %321 = vmatprep.subr.bf16.mxu0 %v247
    %322 = vmatpush1.bf16.msra.mxu0 %v246
    %323 = vmatprep.subr.bf16.mxu0 %v249
    %324 = vmatpush1.bf16.msra.mxu0 %v248
    %325 = vmatprep.subr.bf16.mxu0 %v274
    %326 = vmatpush1.bf16.msra.mxu0 %v271
    %327 = vmatprep.subr.bf16.mxu0 0
    %328 = vmatpush1.bf16.msra.mxu0 0
    %329 = vmatprep.subr.bf16.mxu0 0
    %330 = vmatpush1.bf16.msra.mxu0 0
    %331 = vmatprep.subr.bf16.mxu0 0
    %332 = vmatpush1.bf16.msra.mxu0 0
    %333 = vmatprep.subr.bf16.mxu0 0
    %334 = vmatpush1.bf16.msra.mxu0 0
    %335 = vmatprep.subr.bf16.mxu0 0
    %336 = vmatpush1.bf16.msra.mxu0 0
    %337 = vmatprep.subr.bf16.mxu0 0
    %338 = vmatpush1.bf16.msra.mxu0 0
    %339 = vmatprep.subr.bf16.mxu0 0
    %340 = vmatpush1.bf16.msra.mxu0 0
    %341 = vmatprep.subr.bf16.mxu0 0
    %342 = vmatpush1.bf16.msra.mxu0 0
    %343 = vmatprep.subr.bf16.mxu0 0
    %344 = vmatpush1.bf16.msra.mxu0 0
    %345 = vmatprep.subr.bf16.mxu0 0
    %346 = vmatpush1.bf16.msra.mxu0 0
    %347 = vmatprep.subr.bf16.mxu0 0
    %348 = vmatpush1.bf16.msra.mxu0 0
    %349 = vmatprep.mubr.bf16.mxu0 0
    %350 = vmatmul.mubr.bf16.gmra.mrb[0].mxu0 %v261
    %v351 = vpop.f32.mrb[0].mxu0
    %v352 = vadd.f32 %v257, %v351
    %v353 = vpop.f32.mrb[0].mxu0
    %v354 = vadd.f32 %v257, %v353
    %v355 = vpop.f32.mrb[0].mxu0
    %v356 = vpop.f32.mrb[0].mxu0
    %357 = vdwg.mxu0
    %v358 = vmax.f32 %v311, 0.0
    %v359 = vmax.f32 %v313, 0.0
    %v360 = vmax.f32 %v352, 0.0
    %v361 = vmax.f32 %v354, 0.0
    %362 = vst [vmem:[#allocation5] sm:$0xff] %v358
    %363 = vst [vmem:[#allocation5 + $0x8] sm:$0xff] %v359
    %s364 = scalar_lea.vmem [#allocation5], 16
    %365 = vst [vmem:[%s364] sm:$0xff] %v360
    %366 = vst [vmem:[%s364 + $0x8] sm:$0xff] %v361
    // Predicated region
    $region18: #{tpu_custom_call.1} parent=1 // pred_check
      _
    $region19: #{tpu_custom_call.1} parent=1 // pred_check_branch
      %368 = sbr.rel (0) target = $region21
    $region20: #{tpu_custom_call.1} parent=1 // pred_region
      %s370 = ssub.s32 512, 512
      %371 = vsyncadd [#allocation4], %s370
      %s372 = sshll.u32 [#allocation5], 4
      %s373 = int_to_ptr.vmem [resolvable:$true] %s372
      %378 = dma.vmem_to_hbm [thread:$0]  %s373, 512, %s3, [#allocation4], 256, 256, 16
    $region21: #{tpu_custom_call.1} parent=1 // pred_fallthru
      _
    // Predicated region
    $region22: #{tpu_custom_call.1} parent=1 // pred_check
      _
    $region23: #{tpu_custom_call.1} parent=1 // pred_check_branch
      %380 = sbr.rel (0) target = $region25
    $region24: #{tpu_custom_call.1} parent=1 // pred_region
      %381 = dma.done [#allocation4], 512
    $region25: #{tpu_custom_call.1} parent=1 // pred_fallthru
      _
    %382 = vsyncpa [#allocation3], 1
    %383 = vsyncpa [#allocation4], 1

</llo_original>
